<compile_context>
chip_gen: v7x
topology: tpu7x:2x2x1
jax: 0.10.0
libtpu: 0.0.40
codegen_flags: <defaults>
</compile_context>

<pallas_src>
import functools

import jax
import jax.numpy as jnp
from jax.experimental import pallas as pl
from jax.experimental.pallas import tpu as pltpu


def _mapping_kernel(z_ref,
                    w0_ref, b0_ref,
                    w1_ref, b1_ref,
                    w2_ref, b2_ref,
                    w3_ref, b3_ref,
                    w4_ref, b4_ref,
                    w5_ref, b5_ref,
                    o_ref, *, negative_slope):
    # z_ref: (TB, z_dim) batch tile; w*_ref: (in, out) pre-scaled weights;
    # b*_ref: (1, out) biases; o_ref: (TB, w_dim).
    x = z_ref[...].astype(jnp.float32)

    # Layer 0: EqualizedLinear(z_dim -> hidden_dim); no activation follows it
    # in the nn.Sequential (next item is another EqualizedLinear).
    h = jnp.dot(x, w0_ref[...], preferred_element_type=jnp.float32) + b0_ref[...]

    # Layers 1..4: EqualizedLinear(hidden -> hidden) + LeakyReLU(0.1).
    # For 0 < slope < 1, LeakyReLU(h) == max(h, slope*h): one mul + one max on
    # the VPU (cheaper than compare + select).
    for w_ref, b_ref in ((w1_ref, b1_ref), (w2_ref, b2_ref),
                         (w3_ref, b3_ref), (w4_ref, b4_ref)):
        h = jnp.dot(h, w_ref[...], preferred_element_type=jnp.float32) + b_ref[...]
        h = jnp.maximum(h, negative_slope * h)

    # Layer 5: EqualizedLinear(hidden -> w_dim) + ReLU.
    h = jnp.dot(h, w5_ref[...], preferred_element_type=jnp.float32) + b5_ref[...]
    o_ref[...] = jnp.maximum(h, 0.0).astype(o_ref.dtype)


def mapping_forward(z, weights, biases, *, gain=2, block_rows=256):
    """Forward pass of Mapping.

    z:       (B, z_dim) float32 latent vectors.
    weights: list of 6 PyTorch-layout (out_dim, in_dim) weight matrices.
    biases:  list of 6 (out_dim,) bias vectors.
    """
    assert len(weights) == 6 and len(biases) == 6
    B, z_dim = z.shape
    hidden_dim = weights[0].shape[0]
    w_dim = weights[5].shape[0]

    # --- trace-time weight prep: fold equalized-LR scale into the weights and
    # transpose to (in, out) so the kernel does plain x @ W contractions.
    prepped = []
    for w, b in zip(weights, biases):
        out_d, in_d = w.shape
        scale = (gain / in_d) ** 0.5
        prepped.append((jnp.asarray(w, jnp.float32).T * jnp.float32(scale),
                        jnp.asarray(b, jnp.float32).reshape(1, out_d)))

    # --- batch tiling (grid axis is "parallel": pipelining + megacore).
    if B >= block_rows:
        tb = block_rows                      # multiple of 8 → valid sublane tile
    else:
        tb = B                               # full-extent block, no constraint
    b_pad = -(-B // tb) * tb
    z_in = jnp.pad(z, ((0, b_pad - B), (0, 0))) if b_pad != B else z
    grid = (b_pad // tb,)

    # --- specs: batch-tiled activation, resident (constant-index) params.
    in_specs = [pl.BlockSpec((tb, z_dim), lambda i: (i, 0))]
    operands = [z_in]
    for w, b in prepped:
        in_specs.append(pl.BlockSpec(w.shape, lambda i: (0, 0)))
        in_specs.append(pl.BlockSpec(b.shape, lambda i: (0, 0)))
        operands.extend([w, b])
    out_specs = pl.BlockSpec((tb, w_dim), lambda i: (i, 0))

    # Advisory cost estimate so XLA schedules glue around the custom call well.
    flops = 2 * b_pad * (z_dim * hidden_dim + 4 * hidden_dim * hidden_dim
                         + hidden_dim * w_dim)
    bytes_accessed = (z_in.size + sum(w.size + b.size for w, b in prepped)
                      + b_pad * w_dim) * 4
    cost = pl.CostEstimate(flops=flops, transcendentals=0,
                           bytes_accessed=bytes_accessed)

    kernel = functools.partial(_mapping_kernel, negative_slope=0.1)

    out = pl.pallas_call(
        kernel,
        out_shape=jax.ShapeDtypeStruct((b_pad, w_dim), z.dtype),
        grid_spec=pltpu.PrefetchScalarGridSpec(
            num_scalar_prefetch=0,
            grid=grid,
            in_specs=in_specs,
            out_specs=out_specs,
        ),
        compiler_params=pltpu.CompilerParams(
            dimension_semantics=("parallel",)),
        cost_estimate=cost,
    )(*operands)

    return out[:B]


def _ref_mapping(z, weights, biases, gain=2):
    """Pure-JAX reference with the exact PyTorch module semantics."""
    def eq_linear(x, w, b):
        scale = (gain / w.shape[1]) ** 0.5
        return (x * scale) @ w.T + b

    h = eq_linear(z, weights[0], biases[0])
    for i in range(1, 5):
        h = eq_linear(h, weights[i], biases[i])
        h = jnp.where(h >= 0.0, h, 0.1 * h)       # LeakyReLU(0.1)
    h = eq_linear(h, weights[5], biases[5])
    return jnp.maximum(h, 0.0)                    # ReLU


if __name__ == "__main__":
    key = jax.random.PRNGKey(0)

    batch, z_dim, hidden_dim = 8, 32, 32
    w_dim = z_dim

    # Layer dims follow the module: z->h, 4x h->h, h->w.
    layer_dims = [(hidden_dim, z_dim)] + [(hidden_dim, hidden_dim)] * 4 \
                 + [(w_dim, hidden_dim)]

    keys = jax.random.split(key, len(layer_dims) + 1)
    z = jax.random.normal(keys[0], (batch, z_dim), dtype=jnp.float32)
    # nn.init.normal_(weight), nn.init.zeros_(bias)
    weights = [jax.random.normal(k, d, dtype=jnp.float32)
               for k, d in zip(keys[1:], layer_dims)]
    biases = [jnp.zeros((d[0],), dtype=jnp.float32) for d in layer_dims]

    out = mapping_forward(z, weights, biases, gain=2)
    out = jax.block_until_ready(out)

    ref = _ref_mapping(z, weights, biases, gain=2)
    assert out.shape == (batch, w_dim)
    assert jnp.allclose(out, ref, atol=1e-4, rtol=1e-4)

    print("KERNEL_OK")
</pallas_src>

<mosaic_0001>
module attributes {stable_mosaic.version = 11 : i64} {
  func.func @_mapping_kernel(%arg0: i32, %arg1: memref<8x32xf32, #tpu.memory_space<vmem>>, %arg2: memref<32x32xf32, #tpu.memory_space<vmem>>, %arg3: memref<1x32xf32, #tpu.memory_space<vmem>>, %arg4: memref<32x32xf32, #tpu.memory_space<vmem>>, %arg5: memref<1x32xf32, #tpu.memory_space<vmem>>, %arg6: memref<32x32xf32, #tpu.memory_space<vmem>>, %arg7: memref<1x32xf32, #tpu.memory_space<vmem>>, %arg8: memref<32x32xf32, #tpu.memory_space<vmem>>, %arg9: memref<1x32xf32, #tpu.memory_space<vmem>>, %arg10: memref<32x32xf32, #tpu.memory_space<vmem>>, %arg11: memref<1x32xf32, #tpu.memory_space<vmem>>, %arg12: memref<32x32xf32, #tpu.memory_space<vmem>>, %arg13: memref<1x32xf32, #tpu.memory_space<vmem>>, %arg14: memref<8x32xf32, #tpu.memory_space<vmem>>) attributes {dimension_semantics = [#tpu.dimension_semantics<parallel>], iteration_bounds = array<i64: 1>, scalar_prefetch = 0 : i64, scratch_operands = 0 : i64, tpu.core_type = #tpu.core_type<tc>, window_params = [{transform_indices = @transform_0, window_bounds = array<i64: 8, 32>}, {pipeline_mode = #tpu.pipeline_mode<synchronous>, transform_indices = @transform_1, window_bounds = array<i64: 32, 32>}, {pipeline_mode = #tpu.pipeline_mode<synchronous>, transform_indices = @transform_2, window_bounds = array<i64: 1, 32>}, {pipeline_mode = #tpu.pipeline_mode<synchronous>, transform_indices = @transform_3, window_bounds = array<i64: 32, 32>}, {pipeline_mode = #tpu.pipeline_mode<synchronous>, transform_indices = @transform_4, window_bounds = array<i64: 1, 32>}, {pipeline_mode = #tpu.pipeline_mode<synchronous>, transform_indices = @transform_5, window_bounds = array<i64: 32, 32>}, {pipeline_mode = #tpu.pipeline_mode<synchronous>, transform_indices = @transform_6, window_bounds = array<i64: 1, 32>}, {pipeline_mode = #tpu.pipeline_mode<synchronous>, transform_indices = @transform_7, window_bounds = array<i64: 32, 32>}, {pipeline_mode = #tpu.pipeline_mode<synchronous>, transform_indices = @transform_8, window_bounds = array<i64: 1, 32>}, {pipeline_mode = #tpu.pipeline_mode<synchronous>, transform_indices = @transform_9, window_bounds = array<i64: 32, 32>}, {pipeline_mode = #tpu.pipeline_mode<synchronous>, transform_indices = @transform_10, window_bounds = array<i64: 1, 32>}, {pipeline_mode = #tpu.pipeline_mode<synchronous>, transform_indices = @transform_11, window_bounds = array<i64: 32, 32>}, {pipeline_mode = #tpu.pipeline_mode<synchronous>, transform_indices = @transform_12, window_bounds = array<i64: 1, 32>}, {transform_indices = @transform_13, window_bounds = array<i64: 8, 32>}]} {
    %c0 = arith.constant 0 : index
    %c0_0 = arith.constant 0 : index
    %0 = vector.load %arg1[%c0, %c0_0] : memref<8x32xf32, #tpu.memory_space<vmem>>, vector<8x32xf32>
    %c0_1 = arith.constant 0 : index
    %c0_2 = arith.constant 0 : index
    %1 = vector.load %arg2[%c0_1, %c0_2] : memref<32x32xf32, #tpu.memory_space<vmem>>, vector<32x32xf32>
    %cst = arith.constant dense<0.000000e+00> : vector<8x32xf32>
    %2 = tpu.matmul %0, %1, %cst {dimension_numbers = #tpu.dot_dimension_numbers<[1], [0], [0], [1], [0, 0, 1, 1], [], []>} : vector<8x32xf32>, vector<32x32xf32>, vector<8x32xf32> -> vector<8x32xf32>
    %c0_3 = arith.constant 0 : index
    %c0_4 = arith.constant 0 : index
    %3 = vector.load %arg3[%c0_3, %c0_4] : memref<1x32xf32, #tpu.memory_space<vmem>>, vector<1x32xf32>
    %4 = vector.broadcast %3 : vector<1x32xf32> to vector<8x32xf32>
    %5 = arith.addf %2, %4 : vector<8x32xf32>
    %c0_5 = arith.constant 0 : index
    %c0_6 = arith.constant 0 : index
    %6 = vector.load %arg4[%c0_5, %c0_6] : memref<32x32xf32, #tpu.memory_space<vmem>>, vector<32x32xf32>
    %cst_7 = arith.constant dense<0.000000e+00> : vector<8x32xf32>
    %7 = tpu.matmul %5, %6, %cst_7 {dimension_numbers = #tpu.dot_dimension_numbers<[1], [0], [0], [1], [0, 0, 1, 1], [], []>} : vector<8x32xf32>, vector<32x32xf32>, vector<8x32xf32> -> vector<8x32xf32>
    %c0_8 = arith.constant 0 : index
    %c0_9 = arith.constant 0 : index
    %8 = vector.load %arg5[%c0_8, %c0_9] : memref<1x32xf32, #tpu.memory_space<vmem>>, vector<1x32xf32>
    %9 = vector.broadcast %8 : vector<1x32xf32> to vector<8x32xf32>
    %10 = arith.addf %7, %9 : vector<8x32xf32>
    %cst_10 = arith.constant 1.000000e-01 : f32
    %11 = vector.broadcast %cst_10 : f32 to vector<8x32xf32>
    %12 = arith.mulf %11, %10 : vector<8x32xf32>
    %13 = arith.maximumf %10, %12 : vector<8x32xf32>
    %c0_11 = arith.constant 0 : index
    %c0_12 = arith.constant 0 : index
    %14 = vector.load %arg6[%c0_11, %c0_12] : memref<32x32xf32, #tpu.memory_space<vmem>>, vector<32x32xf32>
    %cst_13 = arith.constant dense<0.000000e+00> : vector<8x32xf32>
    %15 = tpu.matmul %13, %14, %cst_13 {dimension_numbers = #tpu.dot_dimension_numbers<[1], [0], [0], [1], [0, 0, 1, 1], [], []>} : vector<8x32xf32>, vector<32x32xf32>, vector<8x32xf32> -> vector<8x32xf32>
    %c0_14 = arith.constant 0 : index
    %c0_15 = arith.constant 0 : index
    %16 = vector.load %arg7[%c0_14, %c0_15] : memref<1x32xf32, #tpu.memory_space<vmem>>, vector<1x32xf32>
    %17 = vector.broadcast %16 : vector<1x32xf32> to vector<8x32xf32>
    %18 = arith.addf %15, %17 : vector<8x32xf32>
    %cst_16 = arith.constant 1.000000e-01 : f32
    %19 = vector.broadcast %cst_16 : f32 to vector<8x32xf32>
    %20 = arith.mulf %19, %18 : vector<8x32xf32>
    %21 = arith.maximumf %18, %20 : vector<8x32xf32>
    %c0_17 = arith.constant 0 : index
    %c0_18 = arith.constant 0 : index
    %22 = vector.load %arg8[%c0_17, %c0_18] : memref<32x32xf32, #tpu.memory_space<vmem>>, vector<32x32xf32>
    %cst_19 = arith.constant dense<0.000000e+00> : vector<8x32xf32>
    %23 = tpu.matmul %21, %22, %cst_19 {dimension_numbers = #tpu.dot_dimension_numbers<[1], [0], [0], [1], [0, 0, 1, 1], [], []>} : vector<8x32xf32>, vector<32x32xf32>, vector<8x32xf32> -> vector<8x32xf32>
    %c0_20 = arith.constant 0 : index
    %c0_21 = arith.constant 0 : index
    %24 = vector.load %arg9[%c0_20, %c0_21] : memref<1x32xf32, #tpu.memory_space<vmem>>, vector<1x32xf32>
    %25 = vector.broadcast %24 : vector<1x32xf32> to vector<8x32xf32>
    %26 = arith.addf %23, %25 : vector<8x32xf32>
    %cst_22 = arith.constant 1.000000e-01 : f32
    %27 = vector.broadcast %cst_22 : f32 to vector<8x32xf32>
    %28 = arith.mulf %27, %26 : vector<8x32xf32>
    %29 = arith.maximumf %26, %28 : vector<8x32xf32>
    %c0_23 = arith.constant 0 : index
    %c0_24 = arith.constant 0 : index
    %30 = vector.load %arg10[%c0_23, %c0_24] : memref<32x32xf32, #tpu.memory_space<vmem>>, vector<32x32xf32>
    %cst_25 = arith.constant dense<0.000000e+00> : vector<8x32xf32>
    %31 = tpu.matmul %29, %30, %cst_25 {dimension_numbers = #tpu.dot_dimension_numbers<[1], [0], [0], [1], [0, 0, 1, 1], [], []>} : vector<8x32xf32>, vector<32x32xf32>, vector<8x32xf32> -> vector<8x32xf32>
    %c0_26 = arith.constant 0 : index
    %c0_27 = arith.constant 0 : index
    %32 = vector.load %arg11[%c0_26, %c0_27] : memref<1x32xf32, #tpu.memory_space<vmem>>, vector<1x32xf32>
    %33 = vector.broadcast %32 : vector<1x32xf32> to vector<8x32xf32>
    %34 = arith.addf %31, %33 : vector<8x32xf32>
    %cst_28 = arith.constant 1.000000e-01 : f32
    %35 = vector.broadcast %cst_28 : f32 to vector<8x32xf32>
    %36 = arith.mulf %35, %34 : vector<8x32xf32>
    %37 = arith.maximumf %34, %36 : vector<8x32xf32>
    %c0_29 = arith.constant 0 : index
    %c0_30 = arith.constant 0 : index
    %38 = vector.load %arg12[%c0_29, %c0_30] : memref<32x32xf32, #tpu.memory_space<vmem>>, vector<32x32xf32>
    %cst_31 = arith.constant dense<0.000000e+00> : vector<8x32xf32>
    %39 = tpu.matmul %37, %38, %cst_31 {dimension_numbers = #tpu.dot_dimension_numbers<[1], [0], [0], [1], [0, 0, 1, 1], [], []>} : vector<8x32xf32>, vector<32x32xf32>, vector<8x32xf32> -> vector<8x32xf32>
    %c0_32 = arith.constant 0 : index
    %c0_33 = arith.constant 0 : index
    %40 = vector.load %arg13[%c0_32, %c0_33] : memref<1x32xf32, #tpu.memory_space<vmem>>, vector<1x32xf32>
    %41 = vector.broadcast %40 : vector<1x32xf32> to vector<8x32xf32>
    %42 = arith.addf %39, %41 : vector<8x32xf32>
    %cst_34 = arith.constant 0.000000e+00 : f32
    %43 = vector.broadcast %cst_34 : f32 to vector<8x32xf32>
    %44 = arith.maximumf %42, %43 : vector<8x32xf32>
    %c0_35 = arith.constant 0 : index
    %c0_36 = arith.constant 0 : index
    %45 = vector.load %arg14[%c0_35, %c0_36] : memref<8x32xf32, #tpu.memory_space<vmem>>, vector<8x32xf32>
    tpu.vector_store %arg14[%c0_35, %c0_36], %44 {strides = array<i32>} : memref<8x32xf32, #tpu.memory_space<vmem>>, vector<8x32xf32>,
    return
  }
  func.func @transform_0(%arg0: i32) -> (i32, i32) {
    %c0_i32 = arith.constant 0 : i32
    %c0_i32_0 = arith.constant 0 : i32
    return %arg0, %c0_i32 : i32, i32
  }
  func.func @transform_1(%arg0: i32) -> (i32, i32) {
    %c0_i32 = arith.constant 0 : i32
    %c0_i32_0 = arith.constant 0 : i32
    %c0_i32_1 = arith.constant 0 : i32
    return %c0_i32, %c0_i32_0 : i32, i32
  }
  func.func @transform_2(%arg0: i32) -> (i32, i32) {
    %c0_i32 = arith.constant 0 : i32
    %c0_i32_0 = arith.constant 0 : i32
    %c0_i32_1 = arith.constant 0 : i32
    return %c0_i32, %c0_i32_0 : i32, i32
  }
  func.func @transform_3(%arg0: i32) -> (i32, i32) {
    %c0_i32 = arith.constant 0 : i32
    %c0_i32_0 = arith.constant 0 : i32
    %c0_i32_1 = arith.constant 0 : i32
    return %c0_i32, %c0_i32_0 : i32, i32
  }
  func.func @transform_4(%arg0: i32) -> (i32, i32) {
    %c0_i32 = arith.constant 0 : i32
    %c0_i32_0 = arith.constant 0 : i32
    %c0_i32_1 = arith.constant 0 : i32
    return %c0_i32, %c0_i32_0 : i32, i32
  }
  func.func @transform_5(%arg0: i32) -> (i32, i32) {
    %c0_i32 = arith.constant 0 : i32
    %c0_i32_0 = arith.constant 0 : i32
    %c0_i32_1 = arith.constant 0 : i32
    return %c0_i32, %c0_i32_0 : i32, i32
  }
  func.func @transform_6(%arg0: i32) -> (i32, i32) {
    %c0_i32 = arith.constant 0 : i32
    %c0_i32_0 = arith.constant 0 : i32
    %c0_i32_1 = arith.constant 0 : i32
    return %c0_i32, %c0_i32_0 : i32, i32
  }
  func.func @transform_7(%arg0: i32) -> (i32, i32) {
    %c0_i32 = arith.constant 0 : i32
    %c0_i32_0 = arith.constant 0 : i32
    %c0_i32_1 = arith.constant 0 : i32
    return %c0_i32, %c0_i32_0 : i32, i32
  }
  func.func @transform_8(%arg0: i32) -> (i32, i32) {
    %c0_i32 = arith.constant 0 : i32
    %c0_i32_0 = arith.constant 0 : i32
    %c0_i32_1 = arith.constant 0 : i32
    return %c0_i32, %c0_i32_0 : i32, i32
  }
  func.func @transform_9(%arg0: i32) -> (i32, i32) {
    %c0_i32 = arith.constant 0 : i32
    %c0_i32_0 = arith.constant 0 : i32
    %c0_i32_1 = arith.constant 0 : i32
    return %c0_i32, %c0_i32_0 : i32, i32
  }
  func.func @transform_10(%arg0: i32) -> (i32, i32) {
    %c0_i32 = arith.constant 0 : i32
    %c0_i32_0 = arith.constant 0 : i32
    %c0_i32_1 = arith.constant 0 : i32
    return %c0_i32, %c0_i32_0 : i32, i32
  }
  func.func @transform_11(%arg0: i32) -> (i32, i32) {
    %c0_i32 = arith.constant 0 : i32
    %c0_i32_0 = arith.constant 0 : i32
    %c0_i32_1 = arith.constant 0 : i32
    return %c0_i32, %c0_i32_0 : i32, i32
  }
  func.func @transform_12(%arg0: i32) -> (i32, i32) {
    %c0_i32 = arith.constant 0 : i32
    %c0_i32_0 = arith.constant 0 : i32
    %c0_i32_1 = arith.constant 0 : i32
    return %c0_i32, %c0_i32_0 : i32, i32
  }
  func.func @transform_13(%arg0: i32) -> (i32, i32) {
    %c0_i32 = arith.constant 0 : i32
    %c0_i32_0 = arith.constant 0 : i32
    return %arg0, %c0_i32 : i32, i32
  }
}

</mosaic_0001>

<llo_original>
// kernel: tpu_custom_call.1
$region0: #{tpu_custom_call.1}
  #allocation0 [shape = 'u32[]', space=smem, size = 0x4, offset = 0x4, fixed_abs, tag = 'smem constant byte address 0x4 - core index']
  #allocation1 [shape = 'u32[144,128]{1,0:T(1,128)}', space=vmem, size = 0x12000, scoped, tag = 'internal scratch']
  %s0 = inlined_call_operand.hbm [shape: f32[8,32], index: 0, kind: input, shape index: {}]
  %s1 = inlined_call_operand.hbm [shape: f32[32,32], index: 1, kind: input, shape index: {}]
  %s2 = inlined_call_operand.vmem [shape: f32[1,32], index: 2, kind: input, shape index: {}]
  %s3 = inlined_call_operand.hbm [shape: f32[32,32], index: 3, kind: input, shape index: {}]
  %s4 = inlined_call_operand.vmem [shape: f32[1,32], index: 4, kind: input, shape index: {}]
  %s5 = inlined_call_operand.hbm [shape: f32[32,32], index: 5, kind: input, shape index: {}]
  %s6 = inlined_call_operand.hbm [shape: f32[1,32], index: 6, kind: input, shape index: {}]
  %s7 = inlined_call_operand.hbm [shape: f32[32,32], index: 7, kind: input, shape index: {}]
  %s8 = inlined_call_operand.hbm [shape: f32[1,32], index: 8, kind: input, shape index: {}]
  %s9 = inlined_call_operand.vmem [shape: f32[32,32], index: 9, kind: input, shape index: {}]
  %s10 = inlined_call_operand.vmem [shape: f32[1,32], index: 10, kind: input, shape index: {}]
  %s11 = inlined_call_operand.hbm [shape: f32[32,32], index: 11, kind: input, shape index: {}]
  %s12 = inlined_call_operand.vmem [shape: f32[1,32], index: 12, kind: input, shape index: {}]
  %s13 = inlined_call_operand.hbm [shape: f32[8,32], index: 13, kind: output, shape index: {}]
  %s14 = sld [smem:[#allocation0]]
  $region94: #{tpu_custom_call.1} parent=0
    _
  %s16 = ssub.s32 1, %s14
  %s17 = scalar_select 0, %s16, %s14
  $region1: #{tpu_custom_call.1} parent=0
    #allocation2 [shape = 'u8[4096]{0}', space=vmem, size = 0x1000, scoped, tag = 'input window, operand 0, single buffered']
    #allocation3 [shape = 's32[1]{0}', space=sflag, size = 0x4, scoped, tag = 'scoped memory for tpu_custom_call.1']
    #allocation4 [shape = 's32[1]{0}', space=sflag, size = 0x4, scoped, tag = 'scoped memory for tpu_custom_call.1']
    #allocation5 [shape = 'u8[16384]{0}', space=vmem, size = 0x4000, scoped, tag = 'input window, operand 1, single buffered']
    #allocation6 [shape = 's32[1]{0}', space=sflag, size = 0x4, scoped, tag = 'scoped memory for tpu_custom_call.1']
    #allocation7 [shape = 'u8[16384]{0}', space=vmem, size = 0x4000, scoped, tag = 'input window, operand 3, single buffered']
    #allocation8 [shape = 'u8[16384]{0}', space=vmem, size = 0x4000, scoped, tag = 'input window, operand 5, single buffered']
    #allocation9 [shape = 's32[1]{0}', space=sflag, size = 0x4, scoped, tag = 'scoped memory for tpu_custom_call.1']
    #allocation10 [shape = 'u8[512]{0}', space=vmem, size = 0x400, scoped, tag = 'input window, operand 6, single buffered']
    #allocation11 [shape = 'u8[16384]{0}', space=vmem, size = 0x4000, scoped, tag = 'input window, operand 7, single buffered']
    #allocation12 [shape = 's32[1]{0}', space=sflag, size = 0x4, scoped, tag = 'scoped memory for tpu_custom_call.1']
    #allocation13 [shape = 'u8[512]{0}', space=vmem, size = 0x400, scoped, tag = 'input window, operand 8, single buffered']
    #allocation14 [shape = 'u8[16384]{0}', space=vmem, size = 0x4000, scoped, tag = 'input window, operand 11, single buffered']
    #allocation15 [shape = 's32[1]{0}', space=sflag, size = 0x4, scoped, tag = 'scoped memory for tpu_custom_call.1']
    #allocation16 [shape = 'u8[4096]{0}', space=vmem, size = 0x1000, scoped, tag = 'output window, operand 0, single buffered']
    %18 = vsyncpa [#allocation3], 0
    %19 = vsyncpa [#allocation6], 0
    %20 = vsyncpa [#allocation9], 0
    %21 = vsyncpa [#allocation12], 0
    %22 = vsyncpa [#allocation15], 0
    %23 = vsyncpa [#allocation4], 0
    // Predicated region
    $region2: #{tpu_custom_call.1} parent=1 // pred_check
      _
    $region3: #{tpu_custom_call.1} parent=1 // pred_check_branch
      %25 = sbr.rel (0) target = $region5
    $region4: #{tpu_custom_call.1} parent=1 // pred_region
      %s27 = ssub.s32 128, 128
      %28 = vsyncadd [#allocation3], %s27
      %s30 = sshll.u32 [#allocation2], 4
      %s31 = int_to_ptr.vmem [resolvable:$true] %s30
      %33 = dma.hbm_to_vmem [thread:$0]  %s0, 128, %s31, [#allocation3]
    $region5: #{tpu_custom_call.1} parent=1 // pred_fallthru
      _
    // Predicated region
    $region6: #{tpu_custom_call.1} parent=1 // pred_check
      _
    $region7: #{tpu_custom_call.1} parent=1 // pred_check_branch
      %35 = sbr.rel (0) target = $region9
    $region8: #{tpu_custom_call.1} parent=1 // pred_region
      %s37 = ssub.s32 512, 512
      %38 = vsyncadd [#allocation6], %s37
      %s39 = sshll.u32 [#allocation5], 4
      %s40 = int_to_ptr.vmem [resolvable:$true] %s39
      %45 = dma.hbm_to_vmem [thread:$0]  %s1, 512, %s40, [#allocation6], 128, 128, 8
    $region9: #{tpu_custom_call.1} parent=1 // pred_fallthru
      _
    // Predicated region
    $region10: #{tpu_custom_call.1} parent=1 // pred_check
      _
    $region11: #{tpu_custom_call.1} parent=1 // pred_check_branch
      %47 = sbr.rel (0) target = $region13
    $region12: #{tpu_custom_call.1} parent=1 // pred_region
      _
    $region13: #{tpu_custom_call.1} parent=1 // pred_fallthru
      _
    // Predicated region
    $region14: #{tpu_custom_call.1} parent=1 // pred_check
      _
    $region15: #{tpu_custom_call.1} parent=1 // pred_check_branch
      %49 = sbr.rel (0) target = $region17
    $region16: #{tpu_custom_call.1} parent=1 // pred_region
      %s51 = ssub.s32 512, 512
      %52 = vsyncadd [#allocation6], %s51
      %s53 = sshll.u32 [#allocation7], 4
      %s54 = int_to_ptr.vmem [resolvable:$true] %s53
      %59 = dma.hbm_to_vmem [thread:$0]  %s3, 512, %s54, [#allocation6], 128, 128, 8
    $region17: #{tpu_custom_call.1} parent=1 // pred_fallthru
      _
    // Predicated region
    $region18: #{tpu_custom_call.1} parent=1 // pred_check
      _
    $region19: #{tpu_custom_call.1} parent=1 // pred_check_branch
      %61 = sbr.rel (0) target = $region21
    $region20: #{tpu_custom_call.1} parent=1 // pred_region
      _
    $region21: #{tpu_custom_call.1} parent=1 // pred_fallthru
      _
    // Predicated region
    $region22: #{tpu_custom_call.1} parent=1 // pred_check
      _
    $region23: #{tpu_custom_call.1} parent=1 // pred_check_branch
      %63 = sbr.rel (0) target = $region25
    $region24: #{tpu_custom_call.1} parent=1 // pred_region
      %s65 = ssub.s32 512, 512
      %66 = vsyncadd [#allocation9], %s65
      %s67 = sshll.u32 [#allocation8], 4
      %s68 = int_to_ptr.vmem [resolvable:$true] %s67
      %73 = dma.hbm_to_vmem [thread:$0]  %s5, 512, %s68, [#allocation9], 128, 128, 8
    $region25: #{tpu_custom_call.1} parent=1 // pred_fallthru
      _
    // Predicated region
    $region26: #{tpu_custom_call.1} parent=1 // pred_check
      _
    $region27: #{tpu_custom_call.1} parent=1 // pred_check_branch
      %75 = sbr.rel (0) target = $region29
    $region28: #{tpu_custom_call.1} parent=1 // pred_region
      %s77 = ssub.s32 16, 16
      %78 = vsyncadd [#allocation9], %s77
      %s80 = sshll.u32 [#allocation10], 4
      %s81 = int_to_ptr.vmem [resolvable:$true] %s80
      %83 = dma.hbm_to_vmem [thread:$0]  %s6, 16, %s81, [#allocation9]
    $region29: #{tpu_custom_call.1} parent=1 // pred_fallthru
      _
    // Predicated region
    $region30: #{tpu_custom_call.1} parent=1 // pred_check
      _
    $region31: #{tpu_custom_call.1} parent=1 // pred_check_branch
      %85 = sbr.rel (0) target = $region33
    $region32: #{tpu_custom_call.1} parent=1 // pred_region
      %s87 = ssub.s32 512, 512
      %88 = vsyncadd [#allocation12], %s87
      %s89 = sshll.u32 [#allocation11], 4
      %s90 = int_to_ptr.vmem [resolvable:$true] %s89
      %95 = dma.hbm_to_vmem [thread:$0]  %s7, 512, %s90, [#allocation12], 128, 128, 8
    $region33: #{tpu_custom_call.1} parent=1 // pred_fallthru
      _
    // Predicated region
    $region34: #{tpu_custom_call.1} parent=1 // pred_check
      _
    $region35: #{tpu_custom_call.1} parent=1 // pred_check_branch
      %97 = sbr.rel (0) target = $region37
    $region36: #{tpu_custom_call.1} parent=1 // pred_region
      %s99 = ssub.s32 16, 16
      %100 = vsyncadd [#allocation12], %s99
      %s102 = sshll.u32 [#allocation13], 4
      %s103 = int_to_ptr.vmem [resolvable:$true] %s102
      %105 = dma.hbm_to_vmem [thread:$0]  %s8, 16, %s103, [#allocation12]
    $region37: #{tpu_custom_call.1} parent=1 // pred_fallthru
      _
    // Predicated region
    $region38: #{tpu_custom_call.1} parent=1 // pred_check
      _
    $region39: #{tpu_custom_call.1} parent=1 // pred_check_branch
      %107 = sbr.rel (0) target = $region41
    $region40: #{tpu_custom_call.1} parent=1 // pred_region
      _
    $region41: #{tpu_custom_call.1} parent=1 // pred_fallthru
      _
    // Predicated region
    $region42: #{tpu_custom_call.1} parent=1 // pred_check
      _
    $region43: #{tpu_custom_call.1} parent=1 // pred_check_branch
      %109 = sbr.rel (0) target = $region45
    $region44: #{tpu_custom_call.1} parent=1 // pred_region
      _
    $region45: #{tpu_custom_call.1} parent=1 // pred_fallthru
      _
    // Predicated region
    $region46: #{tpu_custom_call.1} parent=1 // pred_check
      _
    $region47: #{tpu_custom_call.1} parent=1 // pred_check_branch
      %111 = sbr.rel (0) target = $region49
    $region48: #{tpu_custom_call.1} parent=1 // pred_region
      %s113 = ssub.s32 512, 512
      %114 = vsyncadd [#allocation15], %s113
      %s115 = sshll.u32 [#allocation14], 4
      %s116 = int_to_ptr.vmem [resolvable:$true] %s115
      %121 = dma.hbm_to_vmem [thread:$0]  %s11, 512, %s116, [#allocation15], 128, 128, 8
    $region49: #{tpu_custom_call.1} parent=1 // pred_fallthru
      _
    // Predicated region
    $region50: #{tpu_custom_call.1} parent=1 // pred_check
      _
    $region51: #{tpu_custom_call.1} parent=1 // pred_check_branch
      %123 = sbr.rel (0) target = $region53
    $region52: #{tpu_custom_call.1} parent=1 // pred_region
      _
    $region53: #{tpu_custom_call.1} parent=1 // pred_fallthru
      _
    // Predicated region
    $region54: #{tpu_custom_call.1} parent=1 // pred_check
      _
    $region55: #{tpu_custom_call.1} parent=1 // pred_check_branch
      %125 = sbr.rel (0) target = $region57
    $region56: #{tpu_custom_call.1} parent=1 // pred_region
      %126 = dma.done [#allocation3], 128
    $region57: #{tpu_custom_call.1} parent=1 // pred_fallthru
      _
    // Predicated region
    $region58: #{tpu_custom_call.1} parent=1 // pred_check
      _
    $region59: #{tpu_custom_call.1} parent=1 // pred_check_branch
      %128 = sbr.rel (0) target = $region61
    $region60: #{tpu_custom_call.1} parent=1 // pred_region
      %129 = dma.done [#allocation6], 512
    $region61: #{tpu_custom_call.1} parent=1 // pred_fallthru
      _
    // Predicated region
    $region62: #{tpu_custom_call.1} parent=1 // pred_check
      _
    $region63: #{tpu_custom_call.1} parent=1 // pred_check_branch
      %131 = sbr.rel (0) target = $region65
    $region64: #{tpu_custom_call.1} parent=1 // pred_region
      %132 = dma.done [#allocation6], 512
    $region65: #{tpu_custom_call.1} parent=1 // pred_fallthru
      _
    // Predicated region
    $region66: #{tpu_custom_call.1} parent=1 // pred_check
      _
    $region67: #{tpu_custom_call.1} parent=1 // pred_check_branch
      %134 = sbr.rel (0) target = $region69
    $region68: #{tpu_custom_call.1} parent=1 // pred_region
      %135 = dma.done [#allocation9], 512
    $region69: #{tpu_custom_call.1} parent=1 // pred_fallthru
      _
    // Predicated region
    $region70: #{tpu_custom_call.1} parent=1 // pred_check
      _
    $region71: #{tpu_custom_call.1} parent=1 // pred_check_branch
      %137 = sbr.rel (0) target = $region73
    $region72: #{tpu_custom_call.1} parent=1 // pred_region
      %138 = dma.done [#allocation9], 16
    $region73: #{tpu_custom_call.1} parent=1 // pred_fallthru
      _
    // Predicated region
    $region74: #{tpu_custom_call.1} parent=1 // pred_check
      _
    $region75: #{tpu_custom_call.1} parent=1 // pred_check_branch
      %140 = sbr.rel (0) target = $region77
    $region76: #{tpu_custom_call.1} parent=1 // pred_region
      %141 = dma.done [#allocation12], 512
    $region77: #{tpu_custom_call.1} parent=1 // pred_fallthru
      _
    // Predicated region
    $region78: #{tpu_custom_call.1} parent=1 // pred_check
      _
    $region79: #{tpu_custom_call.1} parent=1 // pred_check_branch
      %143 = sbr.rel (0) target = $region81
    $region80: #{tpu_custom_call.1} parent=1 // pred_region
      %144 = dma.done [#allocation12], 16
    $region81: #{tpu_custom_call.1} parent=1 // pred_fallthru
      _
    // Predicated region
    $region82: #{tpu_custom_call.1} parent=1 // pred_check
      _
    $region83: #{tpu_custom_call.1} parent=1 // pred_check_branch
      %146 = sbr.rel (0) target = $region85
    $region84: #{tpu_custom_call.1} parent=1 // pred_region
      %147 = dma.done [#allocation15], 512
    $region85: #{tpu_custom_call.1} parent=1 // pred_fallthru
      _
    %v148 = vld [vmem:[#allocation2] sm:$0xff]
    %v149 = vld [vmem:[#allocation5] sm:$0xff]
    %v150 = vld [vmem:[#allocation5 + $0x8] sm:$0xff]
    %v151 = vld [vmem:[#allocation5 + $0x10] sm:$0xff]
    %v152 = vld [vmem:[#allocation5 + $0x18] sm:$0xff]
    %v153 = vld [vmem:[%s2] sm:$0x1]
    %v155 = vlaneseq
    %v156 = vshrl.u32 %v155, 7
    %v157 = vsub.s32 0, %v156
    %v158 = vrot.slane %v153, %v157
    %vm160 = vcmask 261120
    %v162 = vsel %vm160, %v148, 0
    %164 = vmatprep.subr.mxu0 0.0
    %165 = vmatpush1.msra.mxu0 %v149
    %166 = vmatprep.subr.mxu0 0.0
    %167 = vmatpush1.msra.mxu0 %v150
    %168 = vmatprep.subr.mxu0 0.0
    %169 = vmatpush1.msra.mxu0 %v151
    %170 = vmatprep.subr.mxu0 0.0
    %171 = vmatpush1.msra.mxu0 %v152
    %172 = vmatprep.subr.mxu0 0.0
    %173 = vmatpush1.msra.mxu0 0.0
    %174 = vmatprep.subr.mxu0 0.0
    %175 = vmatpush1.msra.mxu0 0.0
    %176 = vmatprep.subr.mxu0 0.0
    %177 = vmatpush1.msra.mxu0 0.0
    %178 = vmatprep.subr.mxu0 0.0
    %179 = vmatpush1.msra.mxu0 0.0
    %180 = vmatprep.subr.mxu0 0.0
    %181 = vmatpush1.msra.mxu0 0.0
    %182 = vmatprep.subr.mxu0 0.0
    %183 = vmatpush1.msra.mxu0 0.0
    %184 = vmatprep.subr.mxu0 0.0
    %185 = vmatpush1.msra.mxu0 0.0
    %186 = vmatprep.subr.mxu0 0.0
    %187 = vmatpush1.msra.mxu0 0.0
    %188 = vmatprep.subr.mxu0 0.0
    %189 = vmatpush1.msra.mxu0 0.0
    %190 = vmatprep.subr.mxu0 0.0
    %191 = vmatpush1.msra.mxu0 0.0
    %192 = vmatprep.subr.mxu0 0.0
    %193 = vmatpush1.msra.mxu0 0.0
    %194 = vmatprep.subr.mxu0 0.0
    %195 = vmatpush1.msra.mxu0 0.0
    %196 = vmatprep.subr.mxu0 0.0
    %197 = vmatpush1.msra.mxu0 0.0
    %198 = vmatprep.subr.mxu0 0.0
    %199 = vmatpush1.msra.mxu0 0.0
    %200 = vmatprep.subr.mxu0 0.0
    %201 = vmatpush1.msra.mxu0 0.0
    %202 = vmatprep.subr.mxu0 0.0
    %203 = vmatpush1.msra.mxu0 0.0
    %204 = vmatprep.subr.mxu0 0.0
    %205 = vmatpush1.msra.mxu0 0.0
    %206 = vmatprep.subr.mxu0 0.0
    %207 = vmatpush1.msra.mxu0 0.0
    %208 = vmatprep.subr.mxu0 0.0
    %209 = vmatpush1.msra.mxu0 0.0
    %210 = vmatprep.subr.mxu0 0.0
    %211 = vmatpush1.msra.mxu0 0.0
    %212 = vmatprep.subr.mxu0 0.0
    %213 = vmatpush1.msra.mxu0 0.0
    %214 = vmatprep.subr.mxu0 0.0
    %215 = vmatpush1.msra.mxu0 0.0
    %216 = vmatprep.subr.mxu0 0.0
    %217 = vmatpush1.msra.mxu0 0.0
    %218 = vmatprep.subr.mxu0 0.0
    %219 = vmatpush1.msra.mxu0 0.0
    %220 = vmatprep.subr.mxu0 0.0
    %221 = vmatpush1.msra.mxu0 0.0
    %222 = vmatprep.subr.mxu0 0.0
    %223 = vmatpush1.msra.mxu0 0.0
    %224 = vmatprep.subr.mxu0 0.0
    %225 = vmatpush1.msra.mxu0 0.0
    %226 = vmatprep.subr.mxu0 0.0
    %227 = vmatpush1.msra.mxu0 0.0
    %228 = vmatprep.mubr.f32.mxu0 0.0
    %229 = vmatmul.mubr.f32.gmra.mrb[0].mxu0 %v162
    %v230 = vpop.f32.mrb[0].mxu0
    %v231 = vadd.f32 %v158, %v230
    %v232 = vpop.f32.mrb[0].mxu0
    %233 = vdwg.mxu0
    %v234 = vld [vmem:[#allocation7] sm:$0xff]
    %v235 = vld [vmem:[#allocation7 + $0x8] sm:$0xff]
    %v236 = vld [vmem:[#allocation7 + $0x10] sm:$0xff]
    %v237 = vld [vmem:[#allocation7 + $0x18] sm:$0xff]
    %v238 = vld [vmem:[%s4] sm:$0x1]
    %v240 = vlaneseq
    %v241 = vshrl.u32 %v240, 7
    %v242 = vsub.s32 0, %v241
    %v243 = vrot.slane %v238, %v242
    %v246 = vsel %vm160, %v231, 0
    %248 = vmatprep.subr.mxu0 0.0
    %249 = vmatpush1.msra.mxu0 %v234
    %250 = vmatprep.subr.mxu0 0.0
    %251 = vmatpush1.msra.mxu0 %v235
    %252 = vmatprep.subr.mxu0 0.0
    %253 = vmatpush1.msra.mxu0 %v236
    %254 = vmatprep.subr.mxu0 0.0
    %255 = vmatpush1.msra.mxu0 %v237
    %256 = vmatprep.subr.mxu0 0.0
    %257 = vmatpush1.msra.mxu0 0.0
    %258 = vmatprep.subr.mxu0 0.0
    %259 = vmatpush1.msra.mxu0 0.0
    %260 = vmatprep.subr.mxu0 0.0
    %261 = vmatpush1.msra.mxu0 0.0
    %262 = vmatprep.subr.mxu0 0.0
    %263 = vmatpush1.msra.mxu0 0.0
    %264 = vmatprep.subr.mxu0 0.0
    %265 = vmatpush1.msra.mxu0 0.0
    %266 = vmatprep.subr.mxu0 0.0
    %267 = vmatpush1.msra.mxu0 0.0
    %268 = vmatprep.subr.mxu0 0.0
    %269 = vmatpush1.msra.mxu0 0.0
    %270 = vmatprep.subr.mxu0 0.0
    %271 = vmatpush1.msra.mxu0 0.0
    %272 = vmatprep.subr.mxu0 0.0
    %273 = vmatpush1.msra.mxu0 0.0
    %274 = vmatprep.subr.mxu0 0.0
    %275 = vmatpush1.msra.mxu0 0.0
    %276 = vmatprep.subr.mxu0 0.0
    %277 = vmatpush1.msra.mxu0 0.0
    %278 = vmatprep.subr.mxu0 0.0
    %279 = vmatpush1.msra.mxu0 0.0
    %280 = vmatprep.subr.mxu0 0.0
    %281 = vmatpush1.msra.mxu0 0.0
    %282 = vmatprep.subr.mxu0 0.0
    %283 = vmatpush1.msra.mxu0 0.0
    %284 = vmatprep.subr.mxu0 0.0
    %285 = vmatpush1.msra.mxu0 0.0
    %286 = vmatprep.subr.mxu0 0.0
    %287 = vmatpush1.msra.mxu0 0.0
    %288 = vmatprep.subr.mxu0 0.0
    %289 = vmatpush1.msra.mxu0 0.0
    %290 = vmatprep.subr.mxu0 0.0
    %291 = vmatpush1.msra.mxu0 0.0
    %292 = vmatprep.subr.mxu0 0.0
    %293 = vmatpush1.msra.mxu0 0.0
    %294 = vmatprep.subr.mxu0 0.0
    %295 = vmatpush1.msra.mxu0 0.0
    %296 = vmatprep.subr.mxu0 0.0
    %297 = vmatpush1.msra.mxu0 0.0
    %298 = vmatprep.subr.mxu0 0.0
    %299 = vmatpush1.msra.mxu0 0.0
    %300 = vmatprep.subr.mxu0 0.0
    %301 = vmatpush1.msra.mxu0 0.0
    %302 = vmatprep.subr.mxu0 0.0
    %303 = vmatpush1.msra.mxu0 0.0
    %304 = vmatprep.subr.mxu0 0.0
    %305 = vmatpush1.msra.mxu0 0.0
    %306 = vmatprep.subr.mxu0 0.0
    %307 = vmatpush1.msra.mxu0 0.0
    %308 = vmatprep.subr.mxu0 0.0
    %309 = vmatpush1.msra.mxu0 0.0
    %310 = vmatprep.subr.mxu0 0.0
    %311 = vmatpush1.msra.mxu0 0.0
    %312 = vmatprep.mubr.f32.mxu0 0.0
    %313 = vmatmul.mubr.f32.gmra.mrb[0].mxu0 %v246
    %v314 = vpop.f32.mrb[0].mxu0
    %v315 = vadd.f32 %v243, %v314
    %v316 = vpop.f32.mrb[0].mxu0
    %317 = vdwg.mxu0
    %v318 = vmul.f32 %v315, 0.1
    %v319 = vmax.f32 %v315, %v318
    %v320 = vld [vmem:[#allocation8] sm:$0xff]
    %v321 = vld [vmem:[#allocation8 + $0x8] sm:$0xff]
    %v322 = vld [vmem:[#allocation8 + $0x10] sm:$0xff]
    %v323 = vld [vmem:[#allocation8 + $0x18] sm:$0xff]
    %v324 = vld [vmem:[#allocation10] sm:$0x1]
    %v326 = vlaneseq
    %v327 = vshrl.u32 %v326, 7
    %v328 = vsub.s32 0, %v327
    %v329 = vrot.slane %v324, %v328
    %v332 = vsel %vm160, %v319, 0
    %334 = vmatprep.subr.mxu0 0.0
    %335 = vmatpush1.msra.mxu0 %v320
    %336 = vmatprep.subr.mxu0 0.0
    %337 = vmatpush1.msra.mxu0 %v321
    %338 = vmatprep.subr.mxu0 0.0
    %339 = vmatpush1.msra.mxu0 %v322
    %340 = vmatprep.subr.mxu0 0.0
    %341 = vmatpush1.msra.mxu0 %v323
    %342 = vmatprep.subr.mxu0 0.0
    %343 = vmatpush1.msra.mxu0 0.0
    %344 = vmatprep.subr.mxu0 0.0
    %345 = vmatpush1.msra.mxu0 0.0
    %346 = vmatprep.subr.mxu0 0.0
    %347 = vmatpush1.msra.mxu0 0.0
    %348 = vmatprep.subr.mxu0 0.0
    %349 = vmatpush1.msra.mxu0 0.0
    %350 = vmatprep.subr.mxu0 0.0
    %351 = vmatpush1.msra.mxu0 0.0
    %352 = vmatprep.subr.mxu0 0.0
    %353 = vmatpush1.msra.mxu0 0.0
    %354 = vmatprep.subr.mxu0 0.0
    %355 = vmatpush1.msra.mxu0 0.0
    %356 = vmatprep.subr.mxu0 0.0
    %357 = vmatpush1.msra.mxu0 0.0
    %358 = vmatprep.subr.mxu0 0.0
    %359 = vmatpush1.msra.mxu0 0.0
    %360 = vmatprep.subr.mxu0 0.0
    %361 = vmatpush1.msra.mxu0 0.0
    %362 = vmatprep.subr.mxu0 0.0
    %363 = vmatpush1.msra.mxu0 0.0
    %364 = vmatprep.subr.mxu0 0.0
    %365 = vmatpush1.msra.mxu0 0.0
    %366 = vmatprep.subr.mxu0 0.0
    %367 = vmatpush1.msra.mxu0 0.0
    %368 = vmatprep.subr.mxu0 0.0
    %369 = vmatpush1.msra.mxu0 0.0
    %370 = vmatprep.subr.mxu0 0.0
    %371 = vmatpush1.msra.mxu0 0.0
    %372 = vmatprep.subr.mxu0 0.0
    %373 = vmatpush1.msra.mxu0 0.0
    %374 = vmatprep.subr.mxu0 0.0
    %375 = vmatpush1.msra.mxu0 0.0
    %376 = vmatprep.subr.mxu0 0.0
    %377 = vmatpush1.msra.mxu0 0.0
    %378 = vmatprep.subr.mxu0 0.0
    %379 = vmatpush1.msra.mxu0 0.0
    %380 = vmatprep.subr.mxu0 0.0
    %381 = vmatpush1.msra.mxu0 0.0
    %382 = vmatprep.subr.mxu0 0.0
    %383 = vmatpush1.msra.mxu0 0.0
    %384 = vmatprep.subr.mxu0 0.0
    %385 = vmatpush1.msra.mxu0 0.0
    %386 = vmatprep.subr.mxu0 0.0
    %387 = vmatpush1.msra.mxu0 0.0
    %388 = vmatprep.subr.mxu0 0.0
    %389 = vmatpush1.msra.mxu0 0.0
    %390 = vmatprep.subr.mxu0 0.0
    %391 = vmatpush1.msra.mxu0 0.0
    %392 = vmatprep.subr.mxu0 0.0
    %393 = vmatpush1.msra.mxu0 0.0
    %394 = vmatprep.subr.mxu0 0.0
    %395 = vmatpush1.msra.mxu0 0.0
    %396 = vmatprep.subr.mxu0 0.0
    %397 = vmatpush1.msra.mxu0 0.0
    %398 = vmatprep.mubr.f32.mxu0 0.0
    %399 = vmatmul.mubr.f32.gmra.mrb[0].mxu0 %v332
    %v400 = vpop.f32.mrb[0].mxu0
    %v401 = vadd.f32 %v329, %v400
    %v402 = vpop.f32.mrb[0].mxu0
    %403 = vdwg.mxu0
    %v404 = vmul.f32 %v401, 0.1
    %v405 = vmax.f32 %v401, %v404
    %v406 = vld [vmem:[#allocation11] sm:$0xff]
    %v407 = vld [vmem:[#allocation11 + $0x8] sm:$0xff]
    %v408 = vld [vmem:[#allocation11 + $0x10] sm:$0xff]
    %v409 = vld [vmem:[#allocation11 + $0x18] sm:$0xff]
    %v410 = vld [vmem:[#allocation13] sm:$0x1]
    %v412 = vlaneseq
    %v413 = vshrl.u32 %v412, 7
    %v414 = vsub.s32 0, %v413
    %v415 = vrot.slane %v410, %v414
    %v418 = vsel %vm160, %v405, 0
    %420 = vmatprep.subr.mxu0 0.0
    %421 = vmatpush1.msra.mxu0 %v406
    %422 = vmatprep.subr.mxu0 0.0
    %423 = vmatpush1.msra.mxu0 %v407
    %424 = vmatprep.subr.mxu0 0.0
    %425 = vmatpush1.msra.mxu0 %v408
    %426 = vmatprep.subr.mxu0 0.0
    %427 = vmatpush1.msra.mxu0 %v409
    %428 = vmatprep.subr.mxu0 0.0
    %429 = vmatpush1.msra.mxu0 0.0
    %430 = vmatprep.subr.mxu0 0.0
    %431 = vmatpush1.msra.mxu0 0.0
    %432 = vmatprep.subr.mxu0 0.0
    %433 = vmatpush1.msra.mxu0 0.0
    %434 = vmatprep.subr.mxu0 0.0
    %435 = vmatpush1.msra.mxu0 0.0
    %436 = vmatprep.subr.mxu0 0.0
    %437 = vmatpush1.msra.mxu0 0.0
    %438 = vmatprep.subr.mxu0 0.0
    %439 = vmatpush1.msra.mxu0 0.0
    %440 = vmatprep.subr.mxu0 0.0
    %441 = vmatpush1.msra.mxu0 0.0
    %442 = vmatprep.subr.mxu0 0.0
    %443 = vmatpush1.msra.mxu0 0.0
    %444 = vmatprep.subr.mxu0 0.0
    %445 = vmatpush1.msra.mxu0 0.0
    %446 = vmatprep.subr.mxu0 0.0
    %447 = vmatpush1.msra.mxu0 0.0
    %448 = vmatprep.subr.mxu0 0.0
    %449 = vmatpush1.msra.mxu0 0.0
    %450 = vmatprep.subr.mxu0 0.0
    %451 = vmatpush1.msra.mxu0 0.0
    %452 = vmatprep.subr.mxu0 0.0
    %453 = vmatpush1.msra.mxu0 0.0
    %454 = vmatprep.subr.mxu0 0.0
    %455 = vmatpush1.msra.mxu0 0.0
    %456 = vmatprep.subr.mxu0 0.0
    %457 = vmatpush1.msra.mxu0 0.0
    %458 = vmatprep.subr.mxu0 0.0
    %459 = vmatpush1.msra.mxu0 0.0
    %460 = vmatprep.subr.mxu0 0.0
    %461 = vmatpush1.msra.mxu0 0.0
    %462 = vmatprep.subr.mxu0 0.0
    %463 = vmatpush1.msra.mxu0 0.0
    %464 = vmatprep.subr.mxu0 0.0
    %465 = vmatpush1.msra.mxu0 0.0
    %466 = vmatprep.subr.mxu0 0.0
    %467 = vmatpush1.msra.mxu0 0.0
    %468 = vmatprep.subr.mxu0 0.0
    %469 = vmatpush1.msra.mxu0 0.0
    %470 = vmatprep.subr.mxu0 0.0
    %471 = vmatpush1.msra.mxu0 0.0
    %472 = vmatprep.subr.mxu0 0.0
    %473 = vmatpush1.msra.mxu0 0.0
    %474 = vmatprep.subr.mxu0 0.0
    %475 = vmatpush1.msra.mxu0 0.0
    %476 = vmatprep.subr.mxu0 0.0
    %477 = vmatpush1.msra.mxu0 0.0
    %478 = vmatprep.subr.mxu0 0.0
    %479 = vmatpush1.msra.mxu0 0.0
    %480 = vmatprep.subr.mxu0 0.0
    %481 = vmatpush1.msra.mxu0 0.0
    %482 = vmatprep.subr.mxu0 0.0
    %483 = vmatpush1.msra.mxu0 0.0
    %484 = vmatprep.mubr.f32.mxu0 0.0
    %485 = vmatmul.mubr.f32.gmra.mrb[0].mxu0 %v418
    %v486 = vpop.f32.mrb[0].mxu0
    %v487 = vadd.f32 %v415, %v486
    %v488 = vpop.f32.mrb[0].mxu0
    %489 = vdwg.mxu0
    %v490 = vmul.f32 %v487, 0.1
    %v491 = vmax.f32 %v487, %v490
    %v492 = vld [vmem:[%s9] sm:$0xff]
    %v493 = vld [vmem:[%s9 + $0x8] sm:$0xff]
    %v494 = vld [vmem:[%s9 + $0x10] sm:$0xff]
    %v495 = vld [vmem:[%s9 + $0x18] sm:$0xff]
    %v496 = vld [vmem:[%s10] sm:$0x1]
    %v498 = vlaneseq
    %v499 = vshrl.u32 %v498, 7
    %v500 = vsub.s32 0, %v499
    %v501 = vrot.slane %v496, %v500
    %v504 = vsel %vm160, %v491, 0
    %506 = vmatprep.subr.mxu0 0.0
    %507 = vmatpush1.msra.mxu0 %v492
    %508 = vmatprep.subr.mxu0 0.0
    %509 = vmatpush1.msra.mxu0 %v493
    %510 = vmatprep.subr.mxu0 0.0
    %511 = vmatpush1.msra.mxu0 %v494
    %512 = vmatprep.subr.mxu0 0.0
    %513 = vmatpush1.msra.mxu0 %v495
    %514 = vmatprep.subr.mxu0 0.0
    %515 = vmatpush1.msra.mxu0 0.0
    %516 = vmatprep.subr.mxu0 0.0
    %517 = vmatpush1.msra.mxu0 0.0
    %518 = vmatprep.subr.mxu0 0.0
    %519 = vmatpush1.msra.mxu0 0.0
    %520 = vmatprep.subr.mxu0 0.0
    %521 = vmatpush1.msra.mxu0 0.0
    %522 = vmatprep.subr.mxu0 0.0
    %523 = vmatpush1.msra.mxu0 0.0
    %524 = vmatprep.subr.mxu0 0.0
    %525 = vmatpush1.msra.mxu0 0.0
    %526 = vmatprep.subr.mxu0 0.0
    %527 = vmatpush1.msra.mxu0 0.0
    %528 = vmatprep.subr.mxu0 0.0
    %529 = vmatpush1.msra.mxu0 0.0
    %530 = vmatprep.subr.mxu0 0.0
    %531 = vmatpush1.msra.mxu0 0.0
    %532 = vmatprep.subr.mxu0 0.0
    %533 = vmatpush1.msra.mxu0 0.0
    %534 = vmatprep.subr.mxu0 0.0
    %535 = vmatpush1.msra.mxu0 0.0
    %536 = vmatprep.subr.mxu0 0.0
    %537 = vmatpush1.msra.mxu0 0.0
    %538 = vmatprep.subr.mxu0 0.0
    %539 = vmatpush1.msra.mxu0 0.0
    %540 = vmatprep.subr.mxu0 0.0
    %541 = vmatpush1.msra.mxu0 0.0
    %542 = vmatprep.subr.mxu0 0.0
    %543 = vmatpush1.msra.mxu0 0.0
    %544 = vmatprep.subr.mxu0 0.0
    %545 = vmatpush1.msra.mxu0 0.0
    %546 = vmatprep.subr.mxu0 0.0
    %547 = vmatpush1.msra.mxu0 0.0
    %548 = vmatprep.subr.mxu0 0.0
    %549 = vmatpush1.msra.mxu0 0.0
    %550 = vmatprep.subr.mxu0 0.0
    %551 = vmatpush1.msra.mxu0 0.0
    %552 = vmatprep.subr.mxu0 0.0
    %553 = vmatpush1.msra.mxu0 0.0
    %554 = vmatprep.subr.mxu0 0.0
    %555 = vmatpush1.msra.mxu0 0.0
    %556 = vmatprep.subr.mxu0 0.0
    %557 = vmatpush1.msra.mxu0 0.0
    %558 = vmatprep.subr.mxu0 0.0
    %559 = vmatpush1.msra.mxu0 0.0
    %560 = vmatprep.subr.mxu0 0.0
    %561 = vmatpush1.msra.mxu0 0.0
    %562 = vmatprep.subr.mxu0 0.0
    %563 = vmatpush1.msra.mxu0 0.0
    %564 = vmatprep.subr.mxu0 0.0
    %565 = vmatpush1.msra.mxu0 0.0
    %566 = vmatprep.subr.mxu0 0.0
    %567 = vmatpush1.msra.mxu0 0.0
    %568 = vmatprep.subr.mxu0 0.0
    %569 = vmatpush1.msra.mxu0 0.0
    %570 = vmatprep.mubr.f32.mxu0 0.0
    %571 = vmatmul.mubr.f32.gmra.mrb[0].mxu0 %v504
    %v572 = vpop.f32.mrb[0].mxu0
    %v573 = vadd.f32 %v501, %v572
    %v574 = vpop.f32.mrb[0].mxu0
    %575 = vdwg.mxu0
    %v576 = vmul.f32 %v573, 0.1
    %v577 = vmax.f32 %v573, %v576
    %v578 = vld [vmem:[#allocation14] sm:$0xff]
    %v579 = vld [vmem:[#allocation14 + $0x8] sm:$0xff]
    %v580 = vld [vmem:[#allocation14 + $0x10] sm:$0xff]
    %v581 = vld [vmem:[#allocation14 + $0x18] sm:$0xff]
    %v582 = vld [vmem:[%s12] sm:$0x1]
    %v584 = vlaneseq
    %v585 = vshrl.u32 %v584, 7
    %v586 = vsub.s32 0, %v585
    %v587 = vrot.slane %v582, %v586
    %v590 = vsel %vm160, %v577, 0
    %592 = vmatprep.subr.mxu0 0.0
    %593 = vmatpush1.msra.mxu0 %v578
    %594 = vmatprep.subr.mxu0 0.0
    %595 = vmatpush1.msra.mxu0 %v579
    %596 = vmatprep.subr.mxu0 0.0
    %597 = vmatpush1.msra.mxu0 %v580
    %598 = vmatprep.subr.mxu0 0.0
    %599 = vmatpush1.msra.mxu0 %v581
    %600 = vmatprep.subr.mxu0 0.0
    %601 = vmatpush1.msra.mxu0 0.0
    %602 = vmatprep.subr.mxu0 0.0
    %603 = vmatpush1.msra.mxu0 0.0
    %604 = vmatprep.subr.mxu0 0.0
    %605 = vmatpush1.msra.mxu0 0.0
    %606 = vmatprep.subr.mxu0 0.0
    %607 = vmatpush1.msra.mxu0 0.0
    %608 = vmatprep.subr.mxu0 0.0
    %609 = vmatpush1.msra.mxu0 0.0
    %610 = vmatprep.subr.mxu0 0.0
    %611 = vmatpush1.msra.mxu0 0.0
    %612 = vmatprep.subr.mxu0 0.0
    %613 = vmatpush1.msra.mxu0 0.0
    %614 = vmatprep.subr.mxu0 0.0
    %615 = vmatpush1.msra.mxu0 0.0
    %616 = vmatprep.subr.mxu0 0.0
    %617 = vmatpush1.msra.mxu0 0.0
    %618 = vmatprep.subr.mxu0 0.0
    %619 = vmatpush1.msra.mxu0 0.0
    %620 = vmatprep.subr.mxu0 0.0
    %621 = vmatpush1.msra.mxu0 0.0
    %622 = vmatprep.subr.mxu0 0.0
    %623 = vmatpush1.msra.mxu0 0.0
    %624 = vmatprep.subr.mxu0 0.0
    %625 = vmatpush1.msra.mxu0 0.0
    %626 = vmatprep.subr.mxu0 0.0
    %627 = vmatpush1.msra.mxu0 0.0
    %628 = vmatprep.subr.mxu0 0.0
    %629 = vmatpush1.msra.mxu0 0.0
    %630 = vmatprep.subr.mxu0 0.0
    %631 = vmatpush1.msra.mxu0 0.0
    %632 = vmatprep.subr.mxu0 0.0
    %633 = vmatpush1.msra.mxu0 0.0
    %634 = vmatprep.subr.mxu0 0.0
    %635 = vmatpush1.msra.mxu0 0.0
    %636 = vmatprep.subr.mxu0 0.0
    %637 = vmatpush1.msra.mxu0 0.0
    %638 = vmatprep.subr.mxu0 0.0
    %639 = vmatpush1.msra.mxu0 0.0
    %640 = vmatprep.subr.mxu0 0.0
    %641 = vmatpush1.msra.mxu0 0.0
    %642 = vmatprep.subr.mxu0 0.0
    %643 = vmatpush1.msra.mxu0 0.0
    %644 = vmatprep.subr.mxu0 0.0
    %645 = vmatpush1.msra.mxu0 0.0
    %646 = vmatprep.subr.mxu0 0.0
    %647 = vmatpush1.msra.mxu0 0.0
    %648 = vmatprep.subr.mxu0 0.0
    %649 = vmatpush1.msra.mxu0 0.0
    %650 = vmatprep.subr.mxu0 0.0
    %651 = vmatpush1.msra.mxu0 0.0
    %652 = vmatprep.subr.mxu0 0.0
    %653 = vmatpush1.msra.mxu0 0.0
    %654 = vmatprep.subr.mxu0 0.0
    %655 = vmatpush1.msra.mxu0 0.0
    %656 = vmatprep.mubr.f32.mxu0 0.0
    %657 = vmatmul.mubr.f32.gmra.mrb[0].mxu0 %v590
    %v658 = vpop.f32.mrb[0].mxu0
    %v659 = vadd.f32 %v587, %v658
    %v660 = vpop.f32.mrb[0].mxu0
    %661 = vdwg.mxu0
    %v662 = vmax.f32 %v659, 0.0
    %663 = vst.msk [vmem:[#allocation16] sm:$0xff] %vm160, %v662
    // Predicated region
    $region86: #{tpu_custom_call.1} parent=1 // pred_check
      _
    $region87: #{tpu_custom_call.1} parent=1 // pred_check_branch
      %665 = sbr.rel (0) target = $region89
    $region88: #{tpu_custom_call.1} parent=1 // pred_region
      %s667 = ssub.s32 128, 128
      %668 = vsyncadd [#allocation4], %s667
      %s670 = sshll.u32 [#allocation16], 4
      %s671 = int_to_ptr.vmem [resolvable:$true] %s670
      %673 = dma.vmem_to_hbm [thread:$0]  %s671, 128, %s13, [#allocation4]
    $region89: #{tpu_custom_call.1} parent=1 // pred_fallthru
      _
    // Predicated region
    $region90: #{tpu_custom_call.1} parent=1 // pred_check
      _
    $region91: #{tpu_custom_call.1} parent=1 // pred_check_branch
      %675 = sbr.rel (0) target = $region93
    $region92: #{tpu_custom_call.1} parent=1 // pred_region
      %676 = dma.done [#allocation4], 128
    $region93: #{tpu_custom_call.1} parent=1 // pred_fallthru
      _
    %677 = vsyncpa [#allocation3], 1
    %678 = vsyncpa [#allocation6], 1
    %679 = vsyncpa [#allocation9], 1
    %680 = vsyncpa [#allocation12], 1
    %681 = vsyncpa [#allocation15], 1
    %682 = vsyncpa [#allocation4], 1

</llo_original>
